<compile_context>
chip_gen: v7x
topology: tpu7x:2x2x1
jax: 0.10.0
libtpu: 0.0.40
codegen_flags: <defaults>
</compile_context>

<pallas_src>
import jax
import jax.numpy as jnp
from jax.experimental import pallas as pl
from jax.experimental.pallas import tpu as pltpu

LATDIM = 32       # args.latdim
LEAKY = 0.5       # args.leaky


# ---------------------------------------------------------------------------
# Tiled kernel: out_tile = leaky_max(key_tile @ blockdiag(W1) + tile(b1))
# ---------------------------------------------------------------------------
def _meta_tile_kernel(key_ref, w1_ref, b1_ref, out_ref):
    ret = jnp.dot(key_ref[...], w1_ref[...],
                  preferred_element_type=jnp.float32) + b1_ref[...]
    out_ref[...] = jnp.maximum(LEAKY * ret, ret).astype(out_ref.dtype)


def _default_pack(d):
    """128-lane packing on v5e, 256-lane on v6e/v7x (matches MXU width)."""
    try:
        kind = jax.devices()[0].device_kind.lower()
    except Exception:
        kind = ""
    target = 256 if ("v6" in kind or "v7" in kind) else 128
    return max(1, target // d)


def meta_forward(hyper, key, w_fc1, b_fc1, w_fc2, b_fc2, *,
                 pack=None, tm_max=1024):
    """JAX/Pallas equivalent of meta.forward(hyper, key)."""
    N, D = hyper.shape
    M = key.shape[0]

    # --- hyper-network prologue (tiny, hoisted out of the tiled kernel) -----
    hm = jnp.mean(hyper.astype(jnp.float32), axis=0, keepdims=True)      # [1, D]
    w1 = jnp.reshape(hm @ w_fc1 + b_fc1, (D, D))                         # [D, D]
    b1 = jnp.reshape(hm @ w_fc2 + b_fc2, (1, D))                         # [1, D]

    # --- lane-dense packing: pack logical rows per 128/256-lane vreg row ----
    if pack is None:
        pack = _default_pack(D)
    lanes = pack * D
    w1_bd = jnp.kron(jnp.eye(pack, dtype=jnp.float32), w1)               # [lanes, lanes]
    b1_bd = jnp.tile(b1, (1, pack))                                      # [1, lanes]

    m_pad = (-M) % pack
    key_p = jnp.pad(key, ((0, m_pad), (0, 0))) if m_pad else key
    mp = (M + m_pad) // pack
    key_packed = key_p.reshape(mp, lanes)                                # free reshape

    # Tile packed rows; tm_max is a multiple of 8 so partial grids stay legal,
    # small mp uses a single full-array block.
    tm = mp if mp <= tm_max else tm_max
    grid = (pl.cdiv(mp, tm),)
    rep = lambda i: (0, 0)       # W1/b1 shared by every tile (DMA'd once)

    out_packed = pl.pallas_call(
        _meta_tile_kernel,
        out_shape=jax.ShapeDtypeStruct((mp, lanes), jnp.float32),
        grid=grid,
        in_specs=[
            pl.BlockSpec((tm, lanes), lambda i: (i, 0)),   # packed key tiles
            pl.BlockSpec((lanes, lanes), rep),             # block-diagonal W1
            pl.BlockSpec((1, lanes), rep),                 # tiled b1
        ],
        out_specs=pl.BlockSpec((tm, lanes), lambda i: (i, 0)),
        compiler_params=pltpu.CompilerParams(
            dimension_semantics=("parallel",)),            # shard M-tiles on v7x
    )(key_packed, w1_bd, b1_bd)

    out = out_packed.reshape(mp * pack, D)
    return out[:M] if m_pad else out
    # TODO(synk): optional bf16 cast of key/W1 (f32 accumulate) would recover
    # the ~3x f32-matmul emulation cost on v5e at a small precision tradeoff.


# ---------------------------------------------------------------------------
# Deterministic parameter init (xavier_normal for W, zeros for bias) + reference
# ---------------------------------------------------------------------------
def _xavier_normal(rng, shape):
    fan_in, fan_out = shape
    std = (2.0 / (fan_in + fan_out)) ** 0.5
    return std * jax.random.normal(rng, shape, dtype=jnp.float32)


def _reference(hyper, key, w_fc1, b_fc1, w_fc2, b_fc2):
    D = hyper.shape[1]
    hm = jnp.mean(hyper, axis=0, keepdims=True)
    w1 = jnp.reshape(hm @ w_fc1 + b_fc1, (D, D))
    b1 = hm @ w_fc2 + b_fc2
    ret = key @ w1 + b1
    return jnp.maximum(LEAKY * ret, ret)


if __name__ == "__main__":
    D = LATDIM
    N = 8                                    # hyper rows

    root = jax.random.PRNGKey(0)
    k_hyper, k_key, k_w1, k_w2 = jax.random.split(root, 4)

    hyper = jax.random.normal(k_hyper, (N, D), dtype=jnp.float32)
    w_fc1 = _xavier_normal(k_w1, (D, D * D))
    b_fc1 = jnp.zeros((D * D,), dtype=jnp.float32)
    w_fc2 = _xavier_normal(k_w2, (D, D))
    b_fc2 = jnp.zeros((D,), dtype=jnp.float32)

    ok = True
    for M in (16, 19):                       # 19 exercises the pack-padding path
        key = jax.random.normal(jax.random.fold_in(k_key, M), (M, D),
                                dtype=jnp.float32)
        out = jax.block_until_ready(
            meta_forward(hyper, key, w_fc1, b_fc1, w_fc2, b_fc2))
        ref = _reference(hyper, key, w_fc1, b_fc1, w_fc2, b_fc2)
        assert out.shape == (M, D)
        ok = ok and bool(jnp.allclose(out, ref, atol=1e-4, rtol=1e-4))
    assert ok, "mismatch vs reference"

    print("KERNEL_OK")
</pallas_src>

<mosaic_0001>
module attributes {stable_mosaic.version = 11 : i64} {
  func.func @_meta_tile_kernel(%arg0: i32, %arg1: memref<4x128xf32, #tpu.memory_space<vmem>>, %arg2: memref<128x128xf32, #tpu.memory_space<vmem>>, %arg3: memref<1x128xf32, #tpu.memory_space<vmem>>, %arg4: memref<4x128xf32, #tpu.memory_space<vmem>>) attributes {dimension_semantics = [#tpu.dimension_semantics<parallel>], iteration_bounds = array<i64: 1>, scalar_prefetch = 0 : i64, scratch_operands = 0 : i64, tpu.core_type = #tpu.core_type<tc>, window_params = [{transform_indices = @transform_0, window_bounds = array<i64: 4, 128>}, {pipeline_mode = #tpu.pipeline_mode<synchronous>, transform_indices = @transform_1, window_bounds = array<i64: 128, 128>}, {pipeline_mode = #tpu.pipeline_mode<synchronous>, transform_indices = @transform_2, window_bounds = array<i64: 1, 128>}, {transform_indices = @transform_3, window_bounds = array<i64: 4, 128>}]} {
    %c0 = arith.constant 0 : index
    %c0_0 = arith.constant 0 : index
    %0 = vector.load %arg1[%c0, %c0_0] : memref<4x128xf32, #tpu.memory_space<vmem>>, vector<4x128xf32>
    %c0_1 = arith.constant 0 : index
    %c0_2 = arith.constant 0 : index
    %1 = vector.load %arg2[%c0_1, %c0_2] : memref<128x128xf32, #tpu.memory_space<vmem>>, vector<128x128xf32>
    %cst = arith.constant dense<0.000000e+00> : vector<4x128xf32>
    %2 = tpu.matmul %0, %1, %cst {dimension_numbers = #tpu.dot_dimension_numbers<[1], [0], [0], [1], [0, 0, 1, 1], [], []>} : vector<4x128xf32>, vector<128x128xf32>, vector<4x128xf32> -> vector<4x128xf32>
    %c0_3 = arith.constant 0 : index
    %c0_4 = arith.constant 0 : index
    %3 = vector.load %arg3[%c0_3, %c0_4] : memref<1x128xf32, #tpu.memory_space<vmem>>, vector<1x128xf32>
    %4 = vector.broadcast %3 : vector<1x128xf32> to vector<4x128xf32>
    %5 = arith.addf %2, %4 : vector<4x128xf32>
    %cst_5 = arith.constant 5.000000e-01 : f32
    %6 = vector.broadcast %cst_5 : f32 to vector<4x128xf32>
    %7 = arith.mulf %6, %5 : vector<4x128xf32>
    %8 = arith.maximumf %7, %5 : vector<4x128xf32>
    %c0_6 = arith.constant 0 : index
    %c0_7 = arith.constant 0 : index
    %9 = vector.load %arg4[%c0_6, %c0_7] : memref<4x128xf32, #tpu.memory_space<vmem>>, vector<4x128xf32>
    tpu.vector_store %arg4[%c0_6, %c0_7], %8 {strides = array<i32>} : memref<4x128xf32, #tpu.memory_space<vmem>>, vector<4x128xf32>,
    return
  }
  func.func @transform_0(%arg0: i32) -> (i32, i32) {
    %c0_i32 = arith.constant 0 : i32
    %c0_i32_0 = arith.constant 0 : i32
    return %arg0, %c0_i32 : i32, i32
  }
  func.func @transform_1(%arg0: i32) -> (i32, i32) {
    %c0_i32 = arith.constant 0 : i32
    %c0_i32_0 = arith.constant 0 : i32
    %c0_i32_1 = arith.constant 0 : i32
    return %c0_i32, %c0_i32_0 : i32, i32
  }
  func.func @transform_2(%arg0: i32) -> (i32, i32) {
    %c0_i32 = arith.constant 0 : i32
    %c0_i32_0 = arith.constant 0 : i32
    %c0_i32_1 = arith.constant 0 : i32
    return %c0_i32, %c0_i32_0 : i32, i32
  }
  func.func @transform_3(%arg0: i32) -> (i32, i32) {
    %c0_i32 = arith.constant 0 : i32
    %c0_i32_0 = arith.constant 0 : i32
    return %arg0, %c0_i32 : i32, i32
  }
}

</mosaic_0001>

<llo_original>
// kernel: tpu_custom_call.1
$region0: #{tpu_custom_call.1}
  #allocation0 [shape = 'u32[]', space=smem, size = 0x4, offset = 0x4, fixed_abs, tag = 'smem constant byte address 0x4 - core index']
  #allocation1 [shape = 'u32[144,128]{1,0:T(1,128)}', space=vmem, size = 0x12000, scoped, tag = 'internal scratch']
  %s0 = inlined_call_operand.hbm [shape: f32[4,128], index: 0, kind: input, shape index: {}]
  %s1 = inlined_call_operand.hbm [shape: f32[128,128], index: 1, kind: input, shape index: {}]
  %s2 = inlined_call_operand.vmem [shape: f32[1,128], index: 2, kind: input, shape index: {}]
  %s3 = inlined_call_operand.hbm [shape: f32[4,128], index: 3, kind: output, shape index: {}]
  %s4 = sld [smem:[#allocation0]]
  $region30: #{tpu_custom_call.1} parent=0
    _
  %s6 = ssub.s32 1, %s4
  %s7 = scalar_select 0, %s6, %s4
  $region1: #{tpu_custom_call.1} parent=0
    #allocation2 [shape = 'u8[2048]{0}', space=vmem, size = 0x800, scoped, tag = 'input window, operand 0, single buffered']
    #allocation3 [shape = 's32[1]{0}', space=sflag, size = 0x4, scoped, tag = 'scoped memory for tpu_custom_call.1']
    #allocation4 [shape = 's32[1]{0}', space=sflag, size = 0x4, scoped, tag = 'scoped memory for tpu_custom_call.1']
    #allocation5 [shape = 'u8[65536]{0}', space=vmem, size = 0x10000, scoped, tag = 'input window, operand 1, single buffered']
    #allocation6 [shape = 's32[1]{0}', space=sflag, size = 0x4, scoped, tag = 'scoped memory for tpu_custom_call.1']
    #allocation7 [shape = 'u8[2048]{0}', space=vmem, size = 0x800, scoped, tag = 'output window, operand 0, single buffered']
    %8 = vsyncpa [#allocation3], 0
    %9 = vsyncpa [#allocation6], 0
    %10 = vsyncpa [#allocation4], 0
    // Predicated region
    $region2: #{tpu_custom_call.1} parent=1 // pred_check
      _
    $region3: #{tpu_custom_call.1} parent=1 // pred_check_branch
      %12 = sbr.rel (0) target = $region5
    $region4: #{tpu_custom_call.1} parent=1 // pred_region
      %s14 = ssub.s32 64, 64
      %15 = vsyncadd [#allocation3], %s14
      %s17 = sshll.u32 [#allocation2], 4
      %s18 = int_to_ptr.vmem [resolvable:$true] %s17
      %20 = dma.hbm_to_vmem [thread:$0]  %s0, 64, %s18, [#allocation3]
    $region5: #{tpu_custom_call.1} parent=1 // pred_fallthru
      _
    // Predicated region
    $region6: #{tpu_custom_call.1} parent=1 // pred_check
      _
    $region7: #{tpu_custom_call.1} parent=1 // pred_check_branch
      %22 = sbr.rel (0) target = $region9
    $region8: #{tpu_custom_call.1} parent=1 // pred_region
      %s24 = ssub.s32 2048, 2048
      %25 = vsyncadd [#allocation6], %s24
      %s26 = sshll.u32 [#allocation5], 4
      %s27 = int_to_ptr.vmem [resolvable:$true] %s26
      %32 = dma.hbm_to_vmem [thread:$0]  %s1, 2048, %s27, [#allocation6], 128, 128, 8
    $region9: #{tpu_custom_call.1} parent=1 // pred_fallthru
      _
    // Predicated region
    $region10: #{tpu_custom_call.1} parent=1 // pred_check
      _
    $region11: #{tpu_custom_call.1} parent=1 // pred_check_branch
      %34 = sbr.rel (0) target = $region13
    $region12: #{tpu_custom_call.1} parent=1 // pred_region
      _
    $region13: #{tpu_custom_call.1} parent=1 // pred_fallthru
      _
    // Predicated region
    $region14: #{tpu_custom_call.1} parent=1 // pred_check
      _
    $region15: #{tpu_custom_call.1} parent=1 // pred_check_branch
      %36 = sbr.rel (0) target = $region17
    $region16: #{tpu_custom_call.1} parent=1 // pred_region
      %37 = dma.done [#allocation3], 64
    $region17: #{tpu_custom_call.1} parent=1 // pred_fallthru
      _
    // Predicated region
    $region18: #{tpu_custom_call.1} parent=1 // pred_check
      _
    $region19: #{tpu_custom_call.1} parent=1 // pred_check_branch
      %39 = sbr.rel (0) target = $region21
    $region20: #{tpu_custom_call.1} parent=1 // pred_region
      %40 = dma.done [#allocation6], 2048
    $region21: #{tpu_custom_call.1} parent=1 // pred_fallthru
      _
    %v41 = vld [vmem:[#allocation2] sm:$0xf]
    %v42 = vld [vmem:[#allocation5] sm:$0xff]
    %v43 = vld [vmem:[#allocation5 + $0x8] sm:$0xff]
    %v44 = vld [vmem:[#allocation5 + $0x10] sm:$0xff]
    %v45 = vld [vmem:[#allocation5 + $0x18] sm:$0xff]
    %v46 = vld [vmem:[#allocation5 + $0x20] sm:$0xff]
    %v47 = vld [vmem:[#allocation5 + $0x28] sm:$0xff]
    %v48 = vld [vmem:[#allocation5 + $0x30] sm:$0xff]
    %v49 = vld [vmem:[#allocation5 + $0x38] sm:$0xff]
    %v50 = vld [vmem:[#allocation5 + $0x40] sm:$0xff]
    %v51 = vld [vmem:[#allocation5 + $0x48] sm:$0xff]
    %v52 = vld [vmem:[#allocation5 + $0x50] sm:$0xff]
    %v53 = vld [vmem:[#allocation5 + $0x58] sm:$0xff]
    %v54 = vld [vmem:[#allocation5 + $0x60] sm:$0xff]
    %v55 = vld [vmem:[#allocation5 + $0x68] sm:$0xff]
    %v56 = vld [vmem:[#allocation5 + $0x70] sm:$0xff]
    %v57 = vld [vmem:[#allocation5 + $0x78] sm:$0xff]
    %v58 = vld [vmem:[%s2] sm:$0x1]
    %v60 = vlaneseq
    %v61 = vshrl.u32 %v60, 7
    %v62 = vsub.s32 0, %v61
    %v63 = vrot.slane %v58, %v62
    %65 = vmatprep.subr.mxu0 0.0
    %66 = vmatpush1.msra.mxu0 %v42
    %67 = vmatprep.subr.mxu0 0.0
    %68 = vmatpush1.msra.mxu0 %v43
    %69 = vmatprep.subr.mxu0 0.0
    %70 = vmatpush1.msra.mxu0 %v44
    %71 = vmatprep.subr.mxu0 0.0
    %72 = vmatpush1.msra.mxu0 %v45
    %73 = vmatprep.subr.mxu0 0.0
    %74 = vmatpush1.msra.mxu0 %v46
    %75 = vmatprep.subr.mxu0 0.0
    %76 = vmatpush1.msra.mxu0 %v47
    %77 = vmatprep.subr.mxu0 0.0
    %78 = vmatpush1.msra.mxu0 %v48
    %79 = vmatprep.subr.mxu0 0.0
    %80 = vmatpush1.msra.mxu0 %v49
    %81 = vmatprep.subr.mxu0 0.0
    %82 = vmatpush1.msra.mxu0 %v50
    %83 = vmatprep.subr.mxu0 0.0
    %84 = vmatpush1.msra.mxu0 %v51
    %85 = vmatprep.subr.mxu0 0.0
    %86 = vmatpush1.msra.mxu0 %v52
    %87 = vmatprep.subr.mxu0 0.0
    %88 = vmatpush1.msra.mxu0 %v53
    %89 = vmatprep.subr.mxu0 0.0
    %90 = vmatpush1.msra.mxu0 %v54
    %91 = vmatprep.subr.mxu0 0.0
    %92 = vmatpush1.msra.mxu0 %v55
    %93 = vmatprep.subr.mxu0 0.0
    %94 = vmatpush1.msra.mxu0 %v56
    %95 = vmatprep.subr.mxu0 0.0
    %96 = vmatpush1.msra.mxu0 %v57
    %97 = vmatprep.subr.mxu0 0.0
    %98 = vmatpush1.msra.mxu0 0.0
    %99 = vmatprep.subr.mxu0 0.0
    %100 = vmatpush1.msra.mxu0 0.0
    %101 = vmatprep.subr.mxu0 0.0
    %102 = vmatpush1.msra.mxu0 0.0
    %103 = vmatprep.subr.mxu0 0.0
    %104 = vmatpush1.msra.mxu0 0.0
    %105 = vmatprep.subr.mxu0 0.0
    %106 = vmatpush1.msra.mxu0 0.0
    %107 = vmatprep.subr.mxu0 0.0
    %108 = vmatpush1.msra.mxu0 0.0
    %109 = vmatprep.subr.mxu0 0.0
    %110 = vmatpush1.msra.mxu0 0.0
    %111 = vmatprep.subr.mxu0 0.0
    %112 = vmatpush1.msra.mxu0 0.0
    %113 = vmatprep.subr.mxu0 0.0
    %114 = vmatpush1.msra.mxu0 0.0
    %115 = vmatprep.subr.mxu0 0.0
    %116 = vmatpush1.msra.mxu0 0.0
    %117 = vmatprep.subr.mxu0 0.0
    %118 = vmatpush1.msra.mxu0 0.0
    %119 = vmatprep.subr.mxu0 0.0
    %120 = vmatpush1.msra.mxu0 0.0
    %121 = vmatprep.subr.mxu0 0.0
    %122 = vmatpush1.msra.mxu0 0.0
    %123 = vmatprep.subr.mxu0 0.0
    %124 = vmatpush1.msra.mxu0 0.0
    %125 = vmatprep.subr.mxu0 0.0
    %126 = vmatpush1.msra.mxu0 0.0
    %127 = vmatprep.subr.mxu0 0.0
    %128 = vmatpush1.msra.mxu0 0.0
    %129 = vmatprep.mubr.f32.mxu0 0.0
    %130 = vmatmul.mubr.f32.gmra.mrb[0].mxu0 %v41
    %v131 = vpop.f32.mrb[0].mxu0
    %v132 = vadd.f32 %v63, %v131
    %v133 = vpop.f32.mrb[0].mxu0
    %134 = vdwg.mxu0
    %v135 = vmul.f32 %v132, 0.5
    %v136 = vmax.f32 %v135, %v132
    %137 = vst [vmem:[#allocation7] sm:$0xf] %v136
    // Predicated region
    $region22: #{tpu_custom_call.1} parent=1 // pred_check
      _
    $region23: #{tpu_custom_call.1} parent=1 // pred_check_branch
      %139 = sbr.rel (0) target = $region25
    $region24: #{tpu_custom_call.1} parent=1 // pred_region
      %s141 = ssub.s32 64, 64
      %142 = vsyncadd [#allocation4], %s141
      %s144 = sshll.u32 [#allocation7], 4
      %s145 = int_to_ptr.vmem [resolvable:$true] %s144
      %147 = dma.vmem_to_hbm [thread:$0]  %s145, 64, %s3, [#allocation4]
    $region25: #{tpu_custom_call.1} parent=1 // pred_fallthru
      _
    // Predicated region
    $region26: #{tpu_custom_call.1} parent=1 // pred_check
      _
    $region27: #{tpu_custom_call.1} parent=1 // pred_check_branch
      %149 = sbr.rel (0) target = $region29
    $region28: #{tpu_custom_call.1} parent=1 // pred_region
      %150 = dma.done [#allocation4], 64
    $region29: #{tpu_custom_call.1} parent=1 // pred_fallthru
      _
    %151 = vsyncpa [#allocation3], 1
    %152 = vsyncpa [#allocation6], 1
    %153 = vsyncpa [#allocation4], 1

</llo_original>
